<compile_context>
chip_gen: v7x
topology: tpu7x:2x2x1
jax: 0.10.0
libtpu: 0.0.40
codegen_flags: <defaults>
</compile_context>

<pallas_src>
import functools

import jax
import jax.numpy as jnp
from jax import lax
from jax.experimental import pallas as pl
from jax.experimental.pallas import tpu as pltpu


def _cdiv(a: int, b: int) -> int:
    return (a + b - 1) // b


def _round_up(x: int, m: int) -> int:
    return _cdiv(x, m) * m


def _choose_tm(M: int, tm: int) -> int:
    """Pick the row-tile size.

    Single full block when everything fits in one step; otherwise aim for big
    tiles and (best effort) an even number of steps so the "parallel" axis
    splits cleanly across v7x's two TensorCores.
    """
    if M <= tm:
        return M  # block dim == array dim -> always a legal block shape
    steps = _cdiv(M, tm)
    if steps % 2:
        steps += 1
    return _round_up(_cdiv(M, steps), 8)


def _nconv_kernel(x_ref, a_ref, o_ref, *, precision):
    # x_ref: (TM, V) row tile, a_ref: (V, W) resident across the grid,
    # o_ref: (TM, W).  Single lane-dense MXU matmul; f32 accumulation.
    o_ref[...] = jnp.dot(
        x_ref[...],
        a_ref[...],
        preferred_element_type=jnp.float32,
        precision=precision,
    ).astype(o_ref.dtype)


@functools.partial(jax.jit, static_argnames=("tm",))
def nconv_nclv(x_nclv: jax.Array, A: jax.Array, *, tm: int = 2048) -> jax.Array:
    """Layout-native nconv: x in (N, C, L, V), returns (N, C, L, W).

    out[n, c, l, w] = sum_v x[n, c, l, v] * A[v, w]

    This is the preferred calling convention for models: no transposes, no
    padding, no output slicing -- only the essential HBM traffic.
    """
    N, C, L, V = x_nclv.shape
    Va, W = A.shape
    assert Va == V, "A first dim must match x node dim"

    out_dtype = x_nclv.dtype
    A = A.astype(out_dtype)  # cast the tiny operand, never the big one

    M = N * C * L
    x2 = x_nclv.reshape(M, V)  # pure reshape: contiguous, no copy

    TM = _choose_tm(M, tm)
    grid = (_cdiv(M, TM),)

    # Exact f32 contraction when inputs are f32; native bf16 MXU rate otherwise.
    precision = (
        lax.Precision.HIGHEST if out_dtype == jnp.float32 else lax.Precision.DEFAULT
    )

    itemsize = jnp.dtype(out_dtype).itemsize
    cost = pl.CostEstimate(
        flops=2 * M * V * W,
        transcendentals=0,
        bytes_accessed=itemsize * (M * V + M * W + V * W),
    )

    out2 = pl.pallas_call(
        functools.partial(_nconv_kernel, precision=precision),
        out_shape=jax.ShapeDtypeStruct((M, W), out_dtype),
        grid_spec=pltpu.PrefetchScalarGridSpec(
            num_scalar_prefetch=0,
            grid=grid,
            in_specs=[
                # Row tile of x; last dim == full V (no pad needed).
                pl.BlockSpec((TM, V), lambda i: (i, 0)),
                # Full A, resident in VMEM across the whole grid.
                pl.BlockSpec((V, W), lambda i: (0, 0)),
            ],
            out_specs=pl.BlockSpec((TM, W), lambda i: (i, 0)),
        ),
        compiler_params=pltpu.CompilerParams(
            dimension_semantics=("parallel",),
        ),
        cost_estimate=cost,
    )(x2, A)

    return out2.reshape(N, C, L, W)


@functools.partial(jax.jit, static_argnames=("tm",))
def nconv(x: jax.Array, A: jax.Array, *, tm: int = 2048) -> jax.Array:
    """PyTorch-compatible nconv: x in (N, C, V, L), returns (N, C, W, L).

    Matches `torch.einsum('ncvl,vw->ncwl', x, A).contiguous()`.  Adds exactly
    one boundary transpose per side; inside a model, prefer `nconv_nclv` and
    keep activations in (N, C, L, V) layout so these transposes vanish.
    """
    x_nclv = jnp.swapaxes(x, 2, 3)          # (N, C, L, V)
    out_nclw = nconv_nclv(x_nclv, A, tm=tm)  # (N, C, L, W)
    return jnp.swapaxes(out_nclw, 2, 3)      # (N, C, W, L)


if __name__ == "__main__":
    key = jax.random.PRNGKey(0)
    kx, ka, kx2, ka2 = jax.random.split(key, 4)

    # GraphWaveNet nconv shapes (small):
    #   x: (batch, channels, num_nodes, seq_len), A: (num_nodes, num_nodes)
    N, C, V, L = 2, 4, 16, 8
    W = V
    x = jax.random.normal(kx, (N, C, V, L), dtype=jnp.float32)
    A = jax.random.normal(ka, (V, W), dtype=jnp.float32)

    out = jax.block_until_ready(nconv(x, A))
    ref = jnp.einsum('ncvl,vw->ncwl', x, A)
    assert out.shape == (N, C, W, L)
    assert jnp.allclose(out, ref, atol=1e-4, rtol=1e-4)

    # Non-square A, dims not (8,128)-aligned, and a multi-step grid with a
    # ragged final row block (tm forced small).
    N2, C2, V2, L2, W2 = 1, 3, 20, 12, 10
    x_b = jax.random.normal(kx2, (N2, C2, V2, L2), dtype=jnp.float32)
    A_b = jax.random.normal(ka2, (V2, W2), dtype=jnp.float32)
    out_b = jax.block_until_ready(nconv(x_b, A_b, tm=16))
    ref_b = jnp.einsum('ncvl,vw->ncwl', x_b, A_b)
    assert out_b.shape == (N2, C2, W2, L2)
    assert jnp.allclose(out_b, ref_b, atol=1e-4, rtol=1e-4)

    # Layout-native entry point (preferred in-model calling convention).
    x_nclv = jnp.swapaxes(x, 2, 3)
    out_nclw = jax.block_until_ready(nconv_nclv(x_nclv, A))
    assert out_nclw.shape == (N, C, L, W)
    assert jnp.allclose(jnp.swapaxes(out_nclw, 2, 3), ref, atol=1e-4, rtol=1e-4)

    print("KERNEL_OK")
</pallas_src>

<mosaic_0001>
module attributes {stable_mosaic.version = 11 : i64} {
  func.func @_nconv_kernel(%arg0: i32, %arg1: memref<64x16xf32, #tpu.memory_space<vmem>>, %arg2: memref<16x16xf32, #tpu.memory_space<vmem>>, %arg3: memref<64x16xf32, #tpu.memory_space<vmem>>) attributes {dimension_semantics = [#tpu.dimension_semantics<parallel>], iteration_bounds = array<i64: 1>, scalar_prefetch = 0 : i64, scratch_operands = 0 : i64, tpu.core_type = #tpu.core_type<tc>, window_params = [{transform_indices = @transform_0, window_bounds = array<i64: 64, 16>}, {pipeline_mode = #tpu.pipeline_mode<synchronous>, transform_indices = @transform_1, window_bounds = array<i64: 16, 16>}, {transform_indices = @transform_2, window_bounds = array<i64: 64, 16>}]} {
    %c0 = arith.constant 0 : index
    %c0_0 = arith.constant 0 : index
    %0 = vector.load %arg1[%c0, %c0_0] : memref<64x16xf32, #tpu.memory_space<vmem>>, vector<64x16xf32>
    %c0_1 = arith.constant 0 : index
    %c0_2 = arith.constant 0 : index
    %1 = vector.load %arg2[%c0_1, %c0_2] : memref<16x16xf32, #tpu.memory_space<vmem>>, vector<16x16xf32>
    %cst = arith.constant dense<0.000000e+00> : vector<64x16xf32>
    %2 = tpu.matmul %0, %1, %cst {dimension_numbers = #tpu.dot_dimension_numbers<[1], [0], [0], [1], [0, 0, 1, 1], [], []>, precision = #tpu.contract_precision<fp32>} : vector<64x16xf32>, vector<16x16xf32>, vector<64x16xf32> -> vector<64x16xf32>
    %c0_3 = arith.constant 0 : index
    %c0_4 = arith.constant 0 : index
    %3 = vector.load %arg3[%c0_3, %c0_4] : memref<64x16xf32, #tpu.memory_space<vmem>>, vector<64x16xf32>
    tpu.vector_store %arg3[%c0_3, %c0_4], %2 {strides = array<i32>} : memref<64x16xf32, #tpu.memory_space<vmem>>, vector<64x16xf32>,
    return
  }
  func.func @transform_0(%arg0: i32) -> (i32, i32) {
    %c0_i32 = arith.constant 0 : i32
    %c0_i32_0 = arith.constant 0 : i32
    return %arg0, %c0_i32 : i32, i32
  }
  func.func @transform_1(%arg0: i32) -> (i32, i32) {
    %c0_i32 = arith.constant 0 : i32
    %c0_i32_0 = arith.constant 0 : i32
    %c0_i32_1 = arith.constant 0 : i32
    return %c0_i32, %c0_i32_0 : i32, i32
  }
  func.func @transform_2(%arg0: i32) -> (i32, i32) {
    %c0_i32 = arith.constant 0 : i32
    %c0_i32_0 = arith.constant 0 : i32
    return %arg0, %c0_i32 : i32, i32
  }
}

</mosaic_0001>

<llo_original>
// kernel: nconv_nclv.1
$region0: #{nconv_nclv.1}
  #allocation0 [shape = 'u32[]', space=smem, size = 0x4, offset = 0x4, fixed_abs, tag = 'smem constant byte address 0x4 - core index']
  #allocation1 [shape = 'u32[144,128]{1,0:T(1,128)}', space=vmem, size = 0x12000, scoped, tag = 'internal scratch']
  %s0 = inlined_call_operand.hbm [shape: f32[64,16], index: 0, kind: input, shape index: {}]
  %s1 = inlined_call_operand.hbm [shape: f32[16,16], index: 1, kind: input, shape index: {}]
  %s2 = inlined_call_operand.hbm [shape: f32[64,16], index: 2, kind: output, shape index: {}]
  %s3 = sld [smem:[#allocation0]]
  $region26: #{nconv_nclv.1} parent=0
    _
  %s5 = ssub.s32 1, %s3
  %s6 = scalar_select 0, %s5, %s3
  $region1: #{nconv_nclv.1} parent=0
    #allocation2 [shape = 'u8[32768]{0}', space=vmem, size = 0x8000, scoped, tag = 'input window, operand 0, single buffered']
    #allocation3 [shape = 's32[1]{0}', space=sflag, size = 0x4, scoped, tag = 'scoped memory for nconv_nclv.1']
    #allocation4 [shape = 's32[1]{0}', space=sflag, size = 0x4, scoped, tag = 'scoped memory for nconv_nclv.1']
    #allocation5 [shape = 'u8[8192]{0}', space=vmem, size = 0x2000, scoped, tag = 'input window, operand 1, single buffered']
    #allocation6 [shape = 's32[1]{0}', space=sflag, size = 0x4, scoped, tag = 'scoped memory for nconv_nclv.1']
    #allocation7 [shape = 'u8[32768]{0}', space=vmem, size = 0x8000, scoped, tag = 'output window, operand 0, single buffered']
    %7 = vsyncpa [#allocation3], 0
    %8 = vsyncpa [#allocation6], 0
    %9 = vsyncpa [#allocation4], 0
    // Predicated region
    $region2: #{nconv_nclv.1} parent=1 // pred_check
      _
    $region3: #{nconv_nclv.1} parent=1 // pred_check_branch
      %11 = sbr.rel (0) target = $region5
    $region4: #{nconv_nclv.1} parent=1 // pred_region
      %s13 = ssub.s32 1024, 1024
      %14 = vsyncadd [#allocation3], %s13
      %s15 = sshll.u32 [#allocation2], 4
      %s16 = int_to_ptr.vmem [resolvable:$true] %s15
      %21 = dma.hbm_to_vmem [thread:$0]  %s0, 1024, %s16, [#allocation3], 128, 128, 8
    $region5: #{nconv_nclv.1} parent=1 // pred_fallthru
      _
    // Predicated region
    $region6: #{nconv_nclv.1} parent=1 // pred_check
      _
    $region7: #{nconv_nclv.1} parent=1 // pred_check_branch
      %23 = sbr.rel (0) target = $region9
    $region8: #{nconv_nclv.1} parent=1 // pred_region
      %s25 = ssub.s32 256, 256
      %26 = vsyncadd [#allocation6], %s25
      %s27 = sshll.u32 [#allocation5], 4
      %s28 = int_to_ptr.vmem [resolvable:$true] %s27
      %33 = dma.hbm_to_vmem [thread:$0]  %s1, 256, %s28, [#allocation6], 128, 128, 8
    $region9: #{nconv_nclv.1} parent=1 // pred_fallthru
      _
    // Predicated region
    $region10: #{nconv_nclv.1} parent=1 // pred_check
      _
    $region11: #{nconv_nclv.1} parent=1 // pred_check_branch
      %35 = sbr.rel (0) target = $region13
    $region12: #{nconv_nclv.1} parent=1 // pred_region
      %36 = dma.done [#allocation3], 1024
    $region13: #{nconv_nclv.1} parent=1 // pred_fallthru
      _
    // Predicated region
    $region14: #{nconv_nclv.1} parent=1 // pred_check
      _
    $region15: #{nconv_nclv.1} parent=1 // pred_check_branch
      %38 = sbr.rel (0) target = $region17
    $region16: #{nconv_nclv.1} parent=1 // pred_region
      %39 = dma.done [#allocation6], 256
    $region17: #{nconv_nclv.1} parent=1 // pred_fallthru
      _
    %v40 = vld [vmem:[#allocation2] sm:$0xff]
    %v41 = vld [vmem:[#allocation2 + $0x8] sm:$0xff]
    %v42 = vld [vmem:[#allocation2 + $0x10] sm:$0xff]
    %v43 = vld [vmem:[#allocation2 + $0x18] sm:$0xff]
    %v44 = vld [vmem:[#allocation2 + $0x20] sm:$0xff]
    %v45 = vld [vmem:[#allocation2 + $0x28] sm:$0xff]
    %v46 = vld [vmem:[#allocation2 + $0x30] sm:$0xff]
    %v47 = vld [vmem:[#allocation2 + $0x38] sm:$0xff]
    %v48 = vld [vmem:[#allocation5] sm:$0xff]
    %v49 = vld [vmem:[#allocation5 + $0x8] sm:$0xff]
    %vm50 = vcmask 130048
    %v52 = vsel %vm50, %v40, 0
    %v55 = vsel %vm50, %v41, 0
    %v58 = vsel %vm50, %v42, 0
    %v61 = vsel %vm50, %v43, 0
    %v64 = vsel %vm50, %v44, 0
    %v67 = vsel %vm50, %v45, 0
    %v70 = vsel %vm50, %v46, 0
    %v73 = vsel %vm50, %v47, 0
    %75 = vmatprep.subr.mxu0 0.0
    %v76 = vand.u32 %v48, 4294901760
    %77 = vmatpush1.msra.mxu0 %v76
    %78 = vmatprep.subr.mxu0 0.0
    %v79 = vand.u32 %v49, 4294901760
    %80 = vmatpush1.msra.mxu0 %v79
    %81 = vmatprep.subr.mxu0 0.0
    %82 = vmatpush1.msra.mxu0 0.0
    %83 = vmatprep.subr.mxu0 0.0
    %84 = vmatpush1.msra.mxu0 0.0
    %85 = vmatprep.subr.mxu0 0.0
    %86 = vmatpush1.msra.mxu0 0.0
    %87 = vmatprep.subr.mxu0 0.0
    %88 = vmatpush1.msra.mxu0 0.0
    %89 = vmatprep.subr.mxu0 0.0
    %90 = vmatpush1.msra.mxu0 0.0
    %91 = vmatprep.subr.mxu0 0.0
    %92 = vmatpush1.msra.mxu0 0.0
    %93 = vmatprep.subr.mxu0 0.0
    %94 = vmatpush1.msra.mxu0 0.0
    %95 = vmatprep.subr.mxu0 0.0
    %96 = vmatpush1.msra.mxu0 0.0
    %97 = vmatprep.subr.mxu0 0.0
    %98 = vmatpush1.msra.mxu0 0.0
    %99 = vmatprep.subr.mxu0 0.0
    %100 = vmatpush1.msra.mxu0 0.0
    %101 = vmatprep.subr.mxu0 0.0
    %102 = vmatpush1.msra.mxu0 0.0
    %103 = vmatprep.subr.mxu0 0.0
    %104 = vmatpush1.msra.mxu0 0.0
    %105 = vmatprep.subr.mxu0 0.0
    %106 = vmatpush1.msra.mxu0 0.0
    %107 = vmatprep.subr.mxu0 0.0
    %108 = vmatpush1.msra.mxu0 0.0
    %109 = vmatprep.subr.mxu0 0.0
    %110 = vmatpush1.msra.mxu0 0.0
    %111 = vmatprep.subr.mxu0 0.0
    %112 = vmatpush1.msra.mxu0 0.0
    %113 = vmatprep.subr.mxu0 0.0
    %114 = vmatpush1.msra.mxu0 0.0
    %115 = vmatprep.subr.mxu0 0.0
    %116 = vmatpush1.msra.mxu0 0.0
    %117 = vmatprep.subr.mxu0 0.0
    %118 = vmatpush1.msra.mxu0 0.0
    %119 = vmatprep.subr.mxu0 0.0
    %120 = vmatpush1.msra.mxu0 0.0
    %121 = vmatprep.subr.mxu0 0.0
    %122 = vmatpush1.msra.mxu0 0.0
    %123 = vmatprep.subr.mxu0 0.0
    %124 = vmatpush1.msra.mxu0 0.0
    %125 = vmatprep.subr.mxu0 0.0
    %126 = vmatpush1.msra.mxu0 0.0
    %127 = vmatprep.subr.mxu0 0.0
    %128 = vmatpush1.msra.mxu0 0.0
    %129 = vmatprep.subr.mxu0 0.0
    %130 = vmatpush1.msra.mxu0 0.0
    %131 = vmatprep.subr.mxu0 0.0
    %132 = vmatpush1.msra.mxu0 0.0
    %133 = vmatprep.subr.mxu0 0.0
    %134 = vmatpush1.msra.mxu0 0.0
    %135 = vmatprep.subr.mxu0 0.0
    %136 = vmatpush1.msra.mxu0 0.0
    %137 = vmatprep.subr.mxu0 0.0
    %138 = vmatpush1.msra.mxu0 0.0
    %139 = vmatprep.subr.mxu0 0.0
    %140 = vmatpush1.msra.mxu0 0.0
    %141 = vmatprep.mubr.f32.mxu0 0.0
    %v142 = vand.u32 %v52, 4294901760
    %v143 = vsub.f32 %v52, %v142
    %v144 = vand.u32 %v143, 4294901760
    %v145 = vsub.f32 %v143, %v144
    %v146 = vand.u32 %v145, 4294901760
    %147 = vmatmul.mubr.f32.gmra.mrb[0].mxu0 %v146
    %v148 = vpop.f32.mrb[0].mxu0
    %v149 = vadd.f32 0.0, %v148
    %v150 = vpop.f32.mrb[0].mxu0
    %151 = vmatprep.mubr.f32.mxu0 0.0
    %v152 = vand.u32 %v55, 4294901760
    %v153 = vsub.f32 %v55, %v152
    %v154 = vand.u32 %v153, 4294901760
    %v155 = vsub.f32 %v153, %v154
    %v156 = vand.u32 %v155, 4294901760
    %157 = vmatmul.mubr.f32.gmra.mrb[0].mxu0 %v156
    %v158 = vpop.f32.mrb[0].mxu0
    %v159 = vadd.f32 0.0, %v158
    %v160 = vpop.f32.mrb[0].mxu0
    %161 = vmatprep.mubr.f32.mxu0 0.0
    %v162 = vand.u32 %v58, 4294901760
    %v163 = vsub.f32 %v58, %v162
    %v164 = vand.u32 %v163, 4294901760
    %v165 = vsub.f32 %v163, %v164
    %v166 = vand.u32 %v165, 4294901760
    %167 = vmatmul.mubr.f32.gmra.mrb[0].mxu0 %v166
    %v168 = vpop.f32.mrb[0].mxu0
    %v169 = vadd.f32 0.0, %v168
    %v170 = vpop.f32.mrb[0].mxu0
    %171 = vmatprep.mubr.f32.mxu0 0.0
    %v172 = vand.u32 %v61, 4294901760
    %v173 = vsub.f32 %v61, %v172
    %v174 = vand.u32 %v173, 4294901760
    %v175 = vsub.f32 %v173, %v174
    %v176 = vand.u32 %v175, 4294901760
    %177 = vmatmul.mubr.f32.gmra.mrb[0].mxu0 %v176
    %v178 = vpop.f32.mrb[0].mxu0
    %v179 = vadd.f32 0.0, %v178
    %v180 = vpop.f32.mrb[0].mxu0
    %181 = vmatprep.mubr.f32.mxu0 0.0
    %v182 = vand.u32 %v64, 4294901760
    %v183 = vsub.f32 %v64, %v182
    %v184 = vand.u32 %v183, 4294901760
    %v185 = vsub.f32 %v183, %v184
    %v186 = vand.u32 %v185, 4294901760
    %187 = vmatmul.mubr.f32.gmra.mrb[0].mxu0 %v186
    %v188 = vpop.f32.mrb[0].mxu0
    %v189 = vadd.f32 0.0, %v188
    %v190 = vpop.f32.mrb[0].mxu0
    %191 = vmatprep.mubr.f32.mxu0 0.0
    %v192 = vand.u32 %v67, 4294901760
    %v193 = vsub.f32 %v67, %v192
    %v194 = vand.u32 %v193, 4294901760
    %v195 = vsub.f32 %v193, %v194
    %v196 = vand.u32 %v195, 4294901760
    %197 = vmatmul.mubr.f32.gmra.mrb[0].mxu0 %v196
    %v198 = vpop.f32.mrb[0].mxu0
    %v199 = vadd.f32 0.0, %v198
    %v200 = vpop.f32.mrb[0].mxu0
    %201 = vmatprep.mubr.f32.mxu0 0.0
    %v202 = vand.u32 %v70, 4294901760
    %v203 = vsub.f32 %v70, %v202
    %v204 = vand.u32 %v203, 4294901760
    %v205 = vsub.f32 %v203, %v204
    %v206 = vand.u32 %v205, 4294901760
    %207 = vmatmul.mubr.f32.gmra.mrb[0].mxu0 %v206
    %v208 = vpop.f32.mrb[0].mxu0
    %v209 = vadd.f32 0.0, %v208
    %v210 = vpop.f32.mrb[0].mxu0
    %211 = vmatprep.mubr.f32.mxu0 0.0
    %v212 = vand.u32 %v73, 4294901760
    %v213 = vsub.f32 %v73, %v212
    %v214 = vand.u32 %v213, 4294901760
    %v215 = vsub.f32 %v213, %v214
    %v216 = vand.u32 %v215, 4294901760
    %217 = vmatmul.mubr.f32.gmra.mrb[0].mxu0 %v216
    %v218 = vpop.f32.mrb[0].mxu0
    %v219 = vadd.f32 0.0, %v218
    %v220 = vpop.f32.mrb[0].mxu0
    %221 = vdwg.mxu0
    %222 = vmatprep.subr.mxu0 0.0
    %v223 = vand.u32 %v48, 4294901760
    %v224 = vsub.f32 %v48, %v223
    %v225 = vand.u32 %v224, 4294901760
    %v226 = vsub.f32 %v224, %v225
    %v227 = vand.u32 %v226, 4294901760
    %228 = vmatpush1.msra.mxu0 %v227
    %229 = vmatprep.subr.mxu0 0.0
    %v230 = vand.u32 %v49, 4294901760
    %v231 = vsub.f32 %v49, %v230
    %v232 = vand.u32 %v231, 4294901760
    %v233 = vsub.f32 %v231, %v232
    %v234 = vand.u32 %v233, 4294901760
    %235 = vmatpush1.msra.mxu0 %v234
    %236 = vmatprep.subr.mxu0 0.0
    %237 = vmatpush1.msra.mxu0 0.0
    %238 = vmatprep.subr.mxu0 0.0
    %239 = vmatpush1.msra.mxu0 0.0
    %240 = vmatprep.subr.mxu0 0.0
    %241 = vmatpush1.msra.mxu0 0.0
    %242 = vmatprep.subr.mxu0 0.0
    %243 = vmatpush1.msra.mxu0 0.0
    %244 = vmatprep.subr.mxu0 0.0
    %245 = vmatpush1.msra.mxu0 0.0
    %246 = vmatprep.subr.mxu0 0.0
    %247 = vmatpush1.msra.mxu0 0.0
    %248 = vmatprep.subr.mxu0 0.0
    %249 = vmatpush1.msra.mxu0 0.0
    %250 = vmatprep.subr.mxu0 0.0
    %251 = vmatpush1.msra.mxu0 0.0
    %252 = vmatprep.subr.mxu0 0.0
    %253 = vmatpush1.msra.mxu0 0.0
    %254 = vmatprep.subr.mxu0 0.0
    %255 = vmatpush1.msra.mxu0 0.0
    %256 = vmatprep.subr.mxu0 0.0
    %257 = vmatpush1.msra.mxu0 0.0
    %258 = vmatprep.subr.mxu0 0.0
    %259 = vmatpush1.msra.mxu0 0.0
    %260 = vmatprep.subr.mxu0 0.0
    %261 = vmatpush1.msra.mxu0 0.0
    %262 = vmatprep.subr.mxu0 0.0
    %263 = vmatpush1.msra.mxu0 0.0
    %264 = vmatprep.subr.mxu0 0.0
    %265 = vmatpush1.msra.mxu0 0.0
    %266 = vmatprep.subr.mxu0 0.0
    %267 = vmatpush1.msra.mxu0 0.0
    %268 = vmatprep.subr.mxu0 0.0
    %269 = vmatpush1.msra.mxu0 0.0
    %270 = vmatprep.subr.mxu0 0.0
    %271 = vmatpush1.msra.mxu0 0.0
    %272 = vmatprep.subr.mxu0 0.0
    %273 = vmatpush1.msra.mxu0 0.0
    %274 = vmatprep.subr.mxu0 0.0
    %275 = vmatpush1.msra.mxu0 0.0
    %276 = vmatprep.subr.mxu0 0.0
    %277 = vmatpush1.msra.mxu0 0.0
    %278 = vmatprep.subr.mxu0 0.0
    %279 = vmatpush1.msra.mxu0 0.0
    %280 = vmatprep.subr.mxu0 0.0
    %281 = vmatpush1.msra.mxu0 0.0
    %282 = vmatprep.subr.mxu0 0.0
    %283 = vmatpush1.msra.mxu0 0.0
    %284 = vmatprep.subr.mxu0 0.0
    %285 = vmatpush1.msra.mxu0 0.0
    %286 = vmatprep.subr.mxu0 0.0
    %287 = vmatpush1.msra.mxu0 0.0
    %288 = vmatprep.subr.mxu0 0.0
    %289 = vmatpush1.msra.mxu0 0.0
    %290 = vmatprep.subr.mxu0 0.0
    %291 = vmatpush1.msra.mxu0 0.0
    %292 = vmatprep.subr.mxu0 0.0
    %293 = vmatpush1.msra.mxu0 0.0
    %294 = vmatprep.subr.mxu0 0.0
    %295 = vmatpush1.msra.mxu0 0.0
    %296 = vmatprep.mubr.f32.mxu0 0.0
    %v297 = vand.u32 %v52, 4294901760
    %298 = vmatmul.mubr.f32.gmra.mrb[0].mxu0 %v297
    %v299 = vpop.f32.mrb[0].mxu0
    %v300 = vadd.f32 %v149, %v299
    %v301 = vpop.f32.mrb[0].mxu0
    %302 = vmatprep.mubr.f32.mxu0 0.0
    %v303 = vand.u32 %v55, 4294901760
    %304 = vmatmul.mubr.f32.gmra.mrb[0].mxu0 %v303
    %v305 = vpop.f32.mrb[0].mxu0
    %v306 = vadd.f32 %v159, %v305
    %v307 = vpop.f32.mrb[0].mxu0
    %308 = vmatprep.mubr.f32.mxu0 0.0
    %v309 = vand.u32 %v58, 4294901760
    %310 = vmatmul.mubr.f32.gmra.mrb[0].mxu0 %v309
    %v311 = vpop.f32.mrb[0].mxu0
    %v312 = vadd.f32 %v169, %v311
    %v313 = vpop.f32.mrb[0].mxu0
    %314 = vmatprep.mubr.f32.mxu0 0.0
    %v315 = vand.u32 %v61, 4294901760
    %316 = vmatmul.mubr.f32.gmra.mrb[0].mxu0 %v315
    %v317 = vpop.f32.mrb[0].mxu0
    %v318 = vadd.f32 %v179, %v317
    %v319 = vpop.f32.mrb[0].mxu0
    %320 = vmatprep.mubr.f32.mxu0 0.0
    %v321 = vand.u32 %v64, 4294901760
    %322 = vmatmul.mubr.f32.gmra.mrb[0].mxu0 %v321
    %v323 = vpop.f32.mrb[0].mxu0
    %v324 = vadd.f32 %v189, %v323
    %v325 = vpop.f32.mrb[0].mxu0
    %326 = vmatprep.mubr.f32.mxu0 0.0
    %v327 = vand.u32 %v67, 4294901760
    %328 = vmatmul.mubr.f32.gmra.mrb[0].mxu0 %v327
    %v329 = vpop.f32.mrb[0].mxu0
    %v330 = vadd.f32 %v199, %v329
    %v331 = vpop.f32.mrb[0].mxu0
    %332 = vmatprep.mubr.f32.mxu0 0.0
    %v333 = vand.u32 %v70, 4294901760
    %334 = vmatmul.mubr.f32.gmra.mrb[0].mxu0 %v333
    %v335 = vpop.f32.mrb[0].mxu0
    %v336 = vadd.f32 %v209, %v335
    %v337 = vpop.f32.mrb[0].mxu0
    %338 = vmatprep.mubr.f32.mxu0 0.0
    %v339 = vand.u32 %v73, 4294901760
    %340 = vmatmul.mubr.f32.gmra.mrb[0].mxu0 %v339
    %v341 = vpop.f32.mrb[0].mxu0
    %v342 = vadd.f32 %v219, %v341
    %v343 = vpop.f32.mrb[0].mxu0
    %344 = vdwg.mxu0
    %345 = vmatprep.subr.mxu0 0.0
    %v346 = vand.u32 %v48, 4294901760
    %v347 = vsub.f32 %v48, %v346
    %348 = vmatpush1.msra.mxu0 %v347
    %349 = vmatprep.subr.mxu0 0.0
    %v350 = vand.u32 %v49, 4294901760
    %v351 = vsub.f32 %v49, %v350
    %352 = vmatpush1.msra.mxu0 %v351
    %353 = vmatprep.subr.mxu0 0.0
    %354 = vmatpush1.msra.mxu0 0.0
    %355 = vmatprep.subr.mxu0 0.0
    %356 = vmatpush1.msra.mxu0 0.0
    %357 = vmatprep.subr.mxu0 0.0
    %358 = vmatpush1.msra.mxu0 0.0
    %359 = vmatprep.subr.mxu0 0.0
    %360 = vmatpush1.msra.mxu0 0.0
    %361 = vmatprep.subr.mxu0 0.0
    %362 = vmatpush1.msra.mxu0 0.0
    %363 = vmatprep.subr.mxu0 0.0
    %364 = vmatpush1.msra.mxu0 0.0
    %365 = vmatprep.subr.mxu0 0.0
    %366 = vmatpush1.msra.mxu0 0.0
    %367 = vmatprep.subr.mxu0 0.0
    %368 = vmatpush1.msra.mxu0 0.0
    %369 = vmatprep.subr.mxu0 0.0
    %370 = vmatpush1.msra.mxu0 0.0
    %371 = vmatprep.subr.mxu0 0.0
    %372 = vmatpush1.msra.mxu0 0.0
    %373 = vmatprep.subr.mxu0 0.0
    %374 = vmatpush1.msra.mxu0 0.0
    %375 = vmatprep.subr.mxu0 0.0
    %376 = vmatpush1.msra.mxu0 0.0
    %377 = vmatprep.subr.mxu0 0.0
    %378 = vmatpush1.msra.mxu0 0.0
    %379 = vmatprep.subr.mxu0 0.0
    %380 = vmatpush1.msra.mxu0 0.0
    %381 = vmatprep.subr.mxu0 0.0
    %382 = vmatpush1.msra.mxu0 0.0
    %383 = vmatprep.subr.mxu0 0.0
    %384 = vmatpush1.msra.mxu0 0.0
    %385 = vmatprep.subr.mxu0 0.0
    %386 = vmatpush1.msra.mxu0 0.0
    %387 = vmatprep.subr.mxu0 0.0
    %388 = vmatpush1.msra.mxu0 0.0
    %389 = vmatprep.subr.mxu0 0.0
    %390 = vmatpush1.msra.mxu0 0.0
    %391 = vmatprep.subr.mxu0 0.0
    %392 = vmatpush1.msra.mxu0 0.0
    %393 = vmatprep.subr.mxu0 0.0
    %394 = vmatpush1.msra.mxu0 0.0
    %395 = vmatprep.subr.mxu0 0.0
    %396 = vmatpush1.msra.mxu0 0.0
    %397 = vmatprep.subr.mxu0 0.0
    %398 = vmatpush1.msra.mxu0 0.0
    %399 = vmatprep.subr.mxu0 0.0
    %400 = vmatpush1.msra.mxu0 0.0
    %401 = vmatprep.subr.mxu0 0.0
    %402 = vmatpush1.msra.mxu0 0.0
    %403 = vmatprep.subr.mxu0 0.0
    %404 = vmatpush1.msra.mxu0 0.0
    %405 = vmatprep.subr.mxu0 0.0
    %406 = vmatpush1.msra.mxu0 0.0
    %407 = vmatprep.subr.mxu0 0.0
    %408 = vmatpush1.msra.mxu0 0.0
    %409 = vmatprep.subr.mxu0 0.0
    %410 = vmatpush1.msra.mxu0 0.0
    %411 = vmatprep.subr.mxu0 0.0
    %412 = vmatpush1.msra.mxu0 0.0
    %413 = vmatprep.mubr.f32.mxu0 0.0
    %v414 = vand.u32 %v52, 4294901760
    %v415 = vsub.f32 %v52, %v414
    %416 = vmatmul.mubr.f32.gmra.mrb[0].mxu0 %v415
    %v417 = vpop.f32.mrb[0].mxu0
    %v418 = vadd.f32 %v300, %v417
    %v419 = vpop.f32.mrb[0].mxu0
    %420 = vmatprep.mubr.f32.mxu0 0.0
    %v421 = vand.u32 %v55, 4294901760
    %v422 = vsub.f32 %v55, %v421
    %423 = vmatmul.mubr.f32.gmra.mrb[0].mxu0 %v422
    %v424 = vpop.f32.mrb[0].mxu0
    %v425 = vadd.f32 %v306, %v424
    %v426 = vpop.f32.mrb[0].mxu0
    %427 = vmatprep.mubr.f32.mxu0 0.0
    %v428 = vand.u32 %v58, 4294901760
    %v429 = vsub.f32 %v58, %v428
    %430 = vmatmul.mubr.f32.gmra.mrb[0].mxu0 %v429
    %v431 = vpop.f32.mrb[0].mxu0
    %v432 = vadd.f32 %v312, %v431
    %v433 = vpop.f32.mrb[0].mxu0
    %434 = vmatprep.mubr.f32.mxu0 0.0
    %v435 = vand.u32 %v61, 4294901760
    %v436 = vsub.f32 %v61, %v435
    %437 = vmatmul.mubr.f32.gmra.mrb[0].mxu0 %v436
    %v438 = vpop.f32.mrb[0].mxu0
    %v439 = vadd.f32 %v318, %v438
    %v440 = vpop.f32.mrb[0].mxu0
    %441 = vmatprep.mubr.f32.mxu0 0.0
    %v442 = vand.u32 %v64, 4294901760
    %v443 = vsub.f32 %v64, %v442
    %444 = vmatmul.mubr.f32.gmra.mrb[0].mxu0 %v443
    %v445 = vpop.f32.mrb[0].mxu0
    %v446 = vadd.f32 %v324, %v445
    %v447 = vpop.f32.mrb[0].mxu0
    %448 = vmatprep.mubr.f32.mxu0 0.0
    %v449 = vand.u32 %v67, 4294901760
    %v450 = vsub.f32 %v67, %v449
    %451 = vmatmul.mubr.f32.gmra.mrb[0].mxu0 %v450
    %v452 = vpop.f32.mrb[0].mxu0
    %v453 = vadd.f32 %v330, %v452
    %v454 = vpop.f32.mrb[0].mxu0
    %455 = vmatprep.mubr.f32.mxu0 0.0
    %v456 = vand.u32 %v70, 4294901760
    %v457 = vsub.f32 %v70, %v456
    %458 = vmatmul.mubr.f32.gmra.mrb[0].mxu0 %v457
    %v459 = vpop.f32.mrb[0].mxu0
    %v460 = vadd.f32 %v336, %v459
    %v461 = vpop.f32.mrb[0].mxu0
    %462 = vmatprep.mubr.f32.mxu0 0.0
    %v463 = vand.u32 %v73, 4294901760
    %v464 = vsub.f32 %v73, %v463
    %465 = vmatmul.mubr.f32.gmra.mrb[0].mxu0 %v464
    %v466 = vpop.f32.mrb[0].mxu0
    %v467 = vadd.f32 %v342, %v466
    %v468 = vpop.f32.mrb[0].mxu0
    %469 = vdwg.mxu0
    %470 = vmatprep.subr.mxu0 0.0
    %v471 = vand.u32 %v48, 4294901760
    %472 = vmatpush1.msra.mxu0 %v471
    %473 = vmatprep.subr.mxu0 0.0
    %v474 = vand.u32 %v49, 4294901760
    %475 = vmatpush1.msra.mxu0 %v474
    %476 = vmatprep.subr.mxu0 0.0
    %477 = vmatpush1.msra.mxu0 0.0
    %478 = vmatprep.subr.mxu0 0.0
    %479 = vmatpush1.msra.mxu0 0.0
    %480 = vmatprep.subr.mxu0 0.0
    %481 = vmatpush1.msra.mxu0 0.0
    %482 = vmatprep.subr.mxu0 0.0
    %483 = vmatpush1.msra.mxu0 0.0
    %484 = vmatprep.subr.mxu0 0.0
    %485 = vmatpush1.msra.mxu0 0.0
    %486 = vmatprep.subr.mxu0 0.0
    %487 = vmatpush1.msra.mxu0 0.0
    %488 = vmatprep.subr.mxu0 0.0
    %489 = vmatpush1.msra.mxu0 0.0
    %490 = vmatprep.subr.mxu0 0.0
    %491 = vmatpush1.msra.mxu0 0.0
    %492 = vmatprep.subr.mxu0 0.0
    %493 = vmatpush1.msra.mxu0 0.0
    %494 = vmatprep.subr.mxu0 0.0
    %495 = vmatpush1.msra.mxu0 0.0
    %496 = vmatprep.subr.mxu0 0.0
    %497 = vmatpush1.msra.mxu0 0.0
    %498 = vmatprep.subr.mxu0 0.0
    %499 = vmatpush1.msra.mxu0 0.0
    %500 = vmatprep.subr.mxu0 0.0
    %501 = vmatpush1.msra.mxu0 0.0
    %502 = vmatprep.subr.mxu0 0.0
    %503 = vmatpush1.msra.mxu0 0.0
    %504 = vmatprep.subr.mxu0 0.0
    %505 = vmatpush1.msra.mxu0 0.0
    %506 = vmatprep.subr.mxu0 0.0
    %507 = vmatpush1.msra.mxu0 0.0
    %508 = vmatprep.subr.mxu0 0.0
    %509 = vmatpush1.msra.mxu0 0.0
    %510 = vmatprep.subr.mxu0 0.0
    %511 = vmatpush1.msra.mxu0 0.0
    %512 = vmatprep.subr.mxu0 0.0
    %513 = vmatpush1.msra.mxu0 0.0
    %514 = vmatprep.subr.mxu0 0.0
    %515 = vmatpush1.msra.mxu0 0.0
    %516 = vmatprep.subr.mxu0 0.0
    %517 = vmatpush1.msra.mxu0 0.0
    %518 = vmatprep.subr.mxu0 0.0
    %519 = vmatpush1.msra.mxu0 0.0
    %520 = vmatprep.subr.mxu0 0.0
    %521 = vmatpush1.msra.mxu0 0.0
    %522 = vmatprep.subr.mxu0 0.0
    %523 = vmatpush1.msra.mxu0 0.0
    %524 = vmatprep.subr.mxu0 0.0
    %525 = vmatpush1.msra.mxu0 0.0
    %526 = vmatprep.subr.mxu0 0.0
    %527 = vmatpush1.msra.mxu0 0.0
    %528 = vmatprep.subr.mxu0 0.0
    %529 = vmatpush1.msra.mxu0 0.0
    %530 = vmatprep.subr.mxu0 0.0
    %531 = vmatpush1.msra.mxu0 0.0
    %532 = vmatprep.subr.mxu0 0.0
    %533 = vmatpush1.msra.mxu0 0.0
    %534 = vmatprep.subr.mxu0 0.0
    %535 = vmatpush1.msra.mxu0 0.0
    %536 = vmatprep.mubr.f32.mxu0 0.0
    %v537 = vand.u32 %v52, 4294901760
    %v538 = vsub.f32 %v52, %v537
    %v539 = vand.u32 %v538, 4294901760
    %540 = vmatmul.mubr.f32.gmra.mrb[0].mxu0 %v539
    %v541 = vpop.f32.mrb[0].mxu0
    %v542 = vadd.f32 %v418, %v541
    %v543 = vpop.f32.mrb[0].mxu0
    %544 = vmatprep.mubr.f32.mxu0 0.0
    %v545 = vand.u32 %v55, 4294901760
    %v546 = vsub.f32 %v55, %v545
    %v547 = vand.u32 %v546, 4294901760
    %548 = vmatmul.mubr.f32.gmra.mrb[0].mxu0 %v547
    %v549 = vpop.f32.mrb[0].mxu0
    %v550 = vadd.f32 %v425, %v549
    %v551 = vpop.f32.mrb[0].mxu0
    %552 = vmatprep.mubr.f32.mxu0 0.0
    %v553 = vand.u32 %v58, 4294901760
    %v554 = vsub.f32 %v58, %v553
    %v555 = vand.u32 %v554, 4294901760
    %556 = vmatmul.mubr.f32.gmra.mrb[0].mxu0 %v555
    %v557 = vpop.f32.mrb[0].mxu0
    %v558 = vadd.f32 %v432, %v557
    %v559 = vpop.f32.mrb[0].mxu0
    %560 = vmatprep.mubr.f32.mxu0 0.0
    %v561 = vand.u32 %v61, 4294901760
    %v562 = vsub.f32 %v61, %v561
    %v563 = vand.u32 %v562, 4294901760
    %564 = vmatmul.mubr.f32.gmra.mrb[0].mxu0 %v563
    %v565 = vpop.f32.mrb[0].mxu0
    %v566 = vadd.f32 %v439, %v565
    %v567 = vpop.f32.mrb[0].mxu0
    %568 = vmatprep.mubr.f32.mxu0 0.0
    %v569 = vand.u32 %v64, 4294901760
    %v570 = vsub.f32 %v64, %v569
    %v571 = vand.u32 %v570, 4294901760
    %572 = vmatmul.mubr.f32.gmra.mrb[0].mxu0 %v571
    %v573 = vpop.f32.mrb[0].mxu0
    %v574 = vadd.f32 %v446, %v573
    %v575 = vpop.f32.mrb[0].mxu0
    %576 = vmatprep.mubr.f32.mxu0 0.0
    %v577 = vand.u32 %v67, 4294901760
    %v578 = vsub.f32 %v67, %v577
    %v579 = vand.u32 %v578, 4294901760
    %580 = vmatmul.mubr.f32.gmra.mrb[0].mxu0 %v579
    %v581 = vpop.f32.mrb[0].mxu0
    %v582 = vadd.f32 %v453, %v581
    %v583 = vpop.f32.mrb[0].mxu0
    %584 = vmatprep.mubr.f32.mxu0 0.0
    %v585 = vand.u32 %v70, 4294901760
    %v586 = vsub.f32 %v70, %v585
    %v587 = vand.u32 %v586, 4294901760
    %588 = vmatmul.mubr.f32.gmra.mrb[0].mxu0 %v587
    %v589 = vpop.f32.mrb[0].mxu0
    %v590 = vadd.f32 %v460, %v589
    %v591 = vpop.f32.mrb[0].mxu0
    %592 = vmatprep.mubr.f32.mxu0 0.0
    %v593 = vand.u32 %v73, 4294901760
    %v594 = vsub.f32 %v73, %v593
    %v595 = vand.u32 %v594, 4294901760
    %596 = vmatmul.mubr.f32.gmra.mrb[0].mxu0 %v595
    %v597 = vpop.f32.mrb[0].mxu0
    %v598 = vadd.f32 %v467, %v597
    %v599 = vpop.f32.mrb[0].mxu0
    %600 = vdwg.mxu0
    %601 = vmatprep.subr.mxu0 0.0
    %v602 = vand.u32 %v48, 4294901760
    %v603 = vsub.f32 %v48, %v602
    %v604 = vand.u32 %v603, 4294901760
    %605 = vmatpush1.msra.mxu0 %v604
    %606 = vmatprep.subr.mxu0 0.0
    %v607 = vand.u32 %v49, 4294901760
    %v608 = vsub.f32 %v49, %v607
    %v609 = vand.u32 %v608, 4294901760
    %610 = vmatpush1.msra.mxu0 %v609
    %611 = vmatprep.subr.mxu0 0.0
    %612 = vmatpush1.msra.mxu0 0.0
    %613 = vmatprep.subr.mxu0 0.0
    %614 = vmatpush1.msra.mxu0 0.0
    %615 = vmatprep.subr.mxu0 0.0
    %616 = vmatpush1.msra.mxu0 0.0
    %617 = vmatprep.subr.mxu0 0.0
    %618 = vmatpush1.msra.mxu0 0.0
    %619 = vmatprep.subr.mxu0 0.0
    %620 = vmatpush1.msra.mxu0 0.0
    %621 = vmatprep.subr.mxu0 0.0
    %622 = vmatpush1.msra.mxu0 0.0
    %623 = vmatprep.subr.mxu0 0.0
    %624 = vmatpush1.msra.mxu0 0.0
    %625 = vmatprep.subr.mxu0 0.0
    %626 = vmatpush1.msra.mxu0 0.0
    %627 = vmatprep.subr.mxu0 0.0
    %628 = vmatpush1.msra.mxu0 0.0
    %629 = vmatprep.subr.mxu0 0.0
    %630 = vmatpush1.msra.mxu0 0.0
    %631 = vmatprep.subr.mxu0 0.0
    %632 = vmatpush1.msra.mxu0 0.0
    %633 = vmatprep.subr.mxu0 0.0
    %634 = vmatpush1.msra.mxu0 0.0
    %635 = vmatprep.subr.mxu0 0.0
    %636 = vmatpush1.msra.mxu0 0.0
    %637 = vmatprep.subr.mxu0 0.0
    %638 = vmatpush1.msra.mxu0 0.0
    %639 = vmatprep.subr.mxu0 0.0
    %640 = vmatpush1.msra.mxu0 0.0
    %641 = vmatprep.subr.mxu0 0.0
    %642 = vmatpush1.msra.mxu0 0.0
    %643 = vmatprep.subr.mxu0 0.0
    %644 = vmatpush1.msra.mxu0 0.0
    %645 = vmatprep.subr.mxu0 0.0
    %646 = vmatpush1.msra.mxu0 0.0
    %647 = vmatprep.subr.mxu0 0.0
    %648 = vmatpush1.msra.mxu0 0.0
    %649 = vmatprep.subr.mxu0 0.0
    %650 = vmatpush1.msra.mxu0 0.0
    %651 = vmatprep.subr.mxu0 0.0
    %652 = vmatpush1.msra.mxu0 0.0
    %653 = vmatprep.subr.mxu0 0.0
    %654 = vmatpush1.msra.mxu0 0.0
    %655 = vmatprep.subr.mxu0 0.0
    %656 = vmatpush1.msra.mxu0 0.0
    %657 = vmatprep.subr.mxu0 0.0
    %658 = vmatpush1.msra.mxu0 0.0
    %659 = vmatprep.subr.mxu0 0.0
    %660 = vmatpush1.msra.mxu0 0.0
    %661 = vmatprep.subr.mxu0 0.0
    %662 = vmatpush1.msra.mxu0 0.0
    %663 = vmatprep.subr.mxu0 0.0
    %664 = vmatpush1.msra.mxu0 0.0
    %665 = vmatprep.subr.mxu0 0.0
    %666 = vmatpush1.msra.mxu0 0.0
    %667 = vmatprep.subr.mxu0 0.0
    %668 = vmatpush1.msra.mxu0 0.0
    %669 = vmatprep.subr.mxu0 0.0
    %670 = vmatpush1.msra.mxu0 0.0
    %671 = vmatprep.mubr.f32.mxu0 0.0
    %v672 = vand.u32 %v52, 4294901760
    %673 = vmatmul.mubr.f32.gmra.mrb[0].mxu0 %v672
    %v674 = vpop.f32.mrb[0].mxu0
    %v675 = vadd.f32 %v542, %v674
    %v676 = vpop.f32.mrb[0].mxu0
    %677 = vmatprep.mubr.f32.mxu0 0.0
    %v678 = vand.u32 %v55, 4294901760
    %679 = vmatmul.mubr.f32.gmra.mrb[0].mxu0 %v678
    %v680 = vpop.f32.mrb[0].mxu0
    %v681 = vadd.f32 %v550, %v680
    %v682 = vpop.f32.mrb[0].mxu0
    %683 = vmatprep.mubr.f32.mxu0 0.0
    %v684 = vand.u32 %v58, 4294901760
    %685 = vmatmul.mubr.f32.gmra.mrb[0].mxu0 %v684
    %v686 = vpop.f32.mrb[0].mxu0
    %v687 = vadd.f32 %v558, %v686
    %v688 = vpop.f32.mrb[0].mxu0
    %689 = vmatprep.mubr.f32.mxu0 0.0
    %v690 = vand.u32 %v61, 4294901760
    %691 = vmatmul.mubr.f32.gmra.mrb[0].mxu0 %v690
    %v692 = vpop.f32.mrb[0].mxu0
    %v693 = vadd.f32 %v566, %v692
    %v694 = vpop.f32.mrb[0].mxu0
    %695 = vmatprep.mubr.f32.mxu0 0.0
    %v696 = vand.u32 %v64, 4294901760
    %697 = vmatmul.mubr.f32.gmra.mrb[0].mxu0 %v696
    %v698 = vpop.f32.mrb[0].mxu0
    %v699 = vadd.f32 %v574, %v698
    %v700 = vpop.f32.mrb[0].mxu0
    %701 = vmatprep.mubr.f32.mxu0 0.0
    %v702 = vand.u32 %v67, 4294901760
    %703 = vmatmul.mubr.f32.gmra.mrb[0].mxu0 %v702
    %v704 = vpop.f32.mrb[0].mxu0
    %v705 = vadd.f32 %v582, %v704
    %v706 = vpop.f32.mrb[0].mxu0
    %707 = vmatprep.mubr.f32.mxu0 0.0
    %v708 = vand.u32 %v70, 4294901760
    %709 = vmatmul.mubr.f32.gmra.mrb[0].mxu0 %v708
    %v710 = vpop.f32.mrb[0].mxu0
    %v711 = vadd.f32 %v590, %v710
    %v712 = vpop.f32.mrb[0].mxu0
    %713 = vmatprep.mubr.f32.mxu0 0.0
    %v714 = vand.u32 %v73, 4294901760
    %715 = vmatmul.mubr.f32.gmra.mrb[0].mxu0 %v714
    %v716 = vpop.f32.mrb[0].mxu0
    %v717 = vadd.f32 %v598, %v716
    %v718 = vpop.f32.mrb[0].mxu0
    %719 = vdwg.mxu0
    %720 = vmatprep.subr.mxu0 0.0
    %v721 = vand.u32 %v48, 4294901760
    %722 = vmatpush1.msra.mxu0 %v721
    %723 = vmatprep.subr.mxu0 0.0
    %v724 = vand.u32 %v49, 4294901760
    %725 = vmatpush1.msra.mxu0 %v724
    %726 = vmatprep.subr.mxu0 0.0
    %727 = vmatpush1.msra.mxu0 0.0
    %728 = vmatprep.subr.mxu0 0.0
    %729 = vmatpush1.msra.mxu0 0.0
    %730 = vmatprep.subr.mxu0 0.0
    %731 = vmatpush1.msra.mxu0 0.0
    %732 = vmatprep.subr.mxu0 0.0
    %733 = vmatpush1.msra.mxu0 0.0
    %734 = vmatprep.subr.mxu0 0.0
    %735 = vmatpush1.msra.mxu0 0.0
    %736 = vmatprep.subr.mxu0 0.0
    %737 = vmatpush1.msra.mxu0 0.0
    %738 = vmatprep.subr.mxu0 0.0
    %739 = vmatpush1.msra.mxu0 0.0
    %740 = vmatprep.subr.mxu0 0.0
    %741 = vmatpush1.msra.mxu0 0.0
    %742 = vmatprep.subr.mxu0 0.0
    %743 = vmatpush1.msra.mxu0 0.0
    %744 = vmatprep.subr.mxu0 0.0
    %745 = vmatpush1.msra.mxu0 0.0
    %746 = vmatprep.subr.mxu0 0.0
    %747 = vmatpush1.msra.mxu0 0.0
    %748 = vmatprep.subr.mxu0 0.0
    %749 = vmatpush1.msra.mxu0 0.0
    %750 = vmatprep.subr.mxu0 0.0
    %751 = vmatpush1.msra.mxu0 0.0
    %752 = vmatprep.subr.mxu0 0.0
    %753 = vmatpush1.msra.mxu0 0.0
    %754 = vmatprep.subr.mxu0 0.0
    %755 = vmatpush1.msra.mxu0 0.0
    %756 = vmatprep.subr.mxu0 0.0
    %757 = vmatpush1.msra.mxu0 0.0
    %758 = vmatprep.subr.mxu0 0.0
    %759 = vmatpush1.msra.mxu0 0.0
    %760 = vmatprep.subr.mxu0 0.0
    %761 = vmatpush1.msra.mxu0 0.0
    %762 = vmatprep.subr.mxu0 0.0
    %763 = vmatpush1.msra.mxu0 0.0
    %764 = vmatprep.subr.mxu0 0.0
    %765 = vmatpush1.msra.mxu0 0.0
    %766 = vmatprep.subr.mxu0 0.0
    %767 = vmatpush1.msra.mxu0 0.0
    %768 = vmatprep.subr.mxu0 0.0
    %769 = vmatpush1.msra.mxu0 0.0
    %770 = vmatprep.subr.mxu0 0.0
    %771 = vmatpush1.msra.mxu0 0.0
    %772 = vmatprep.subr.mxu0 0.0
    %773 = vmatpush1.msra.mxu0 0.0
    %774 = vmatprep.subr.mxu0 0.0
    %775 = vmatpush1.msra.mxu0 0.0
    %776 = vmatprep.subr.mxu0 0.0
    %777 = vmatpush1.msra.mxu0 0.0
    %778 = vmatprep.subr.mxu0 0.0
    %779 = vmatpush1.msra.mxu0 0.0
    %780 = vmatprep.subr.mxu0 0.0
    %781 = vmatpush1.msra.mxu0 0.0
    %782 = vmatprep.subr.mxu0 0.0
    %783 = vmatpush1.msra.mxu0 0.0
    %784 = vmatprep.subr.mxu0 0.0
    %785 = vmatpush1.msra.mxu0 0.0
    %786 = vmatprep.mubr.f32.mxu0 0.0
    %v787 = vand.u32 %v52, 4294901760
    %788 = vmatmul.mubr.f32.gmra.mrb[0].mxu0 %v787
    %v789 = vpop.f32.mrb[0].mxu0
    %v790 = vadd.f32 %v675, %v789
    %v791 = vpop.f32.mrb[0].mxu0
    %792 = vmatprep.mubr.f32.mxu0 0.0
    %v793 = vand.u32 %v55, 4294901760
    %794 = vmatmul.mubr.f32.gmra.mrb[0].mxu0 %v793
    %v795 = vpop.f32.mrb[0].mxu0
    %v796 = vadd.f32 %v681, %v795
    %v797 = vpop.f32.mrb[0].mxu0
    %798 = vmatprep.mubr.f32.mxu0 0.0
    %v799 = vand.u32 %v58, 4294901760
    %800 = vmatmul.mubr.f32.gmra.mrb[0].mxu0 %v799
    %v801 = vpop.f32.mrb[0].mxu0
    %v802 = vadd.f32 %v687, %v801
    %v803 = vpop.f32.mrb[0].mxu0
    %804 = vmatprep.mubr.f32.mxu0 0.0
    %v805 = vand.u32 %v61, 4294901760
    %806 = vmatmul.mubr.f32.gmra.mrb[0].mxu0 %v805
    %v807 = vpop.f32.mrb[0].mxu0
    %v808 = vadd.f32 %v693, %v807
    %v809 = vpop.f32.mrb[0].mxu0
    %810 = vmatprep.mubr.f32.mxu0 0.0
    %v811 = vand.u32 %v64, 4294901760
    %812 = vmatmul.mubr.f32.gmra.mrb[0].mxu0 %v811
    %v813 = vpop.f32.mrb[0].mxu0
    %v814 = vadd.f32 %v699, %v813
    %v815 = vpop.f32.mrb[0].mxu0
    %816 = vmatprep.mubr.f32.mxu0 0.0
    %v817 = vand.u32 %v67, 4294901760
    %818 = vmatmul.mubr.f32.gmra.mrb[0].mxu0 %v817
    %v819 = vpop.f32.mrb[0].mxu0
    %v820 = vadd.f32 %v705, %v819
    %v821 = vpop.f32.mrb[0].mxu0
    %822 = vmatprep.mubr.f32.mxu0 0.0
    %v823 = vand.u32 %v70, 4294901760
    %824 = vmatmul.mubr.f32.gmra.mrb[0].mxu0 %v823
    %v825 = vpop.f32.mrb[0].mxu0
    %v826 = vadd.f32 %v711, %v825
    %v827 = vpop.f32.mrb[0].mxu0
    %828 = vmatprep.mubr.f32.mxu0 0.0
    %v829 = vand.u32 %v73, 4294901760
    %830 = vmatmul.mubr.f32.gmra.mrb[0].mxu0 %v829
    %v831 = vpop.f32.mrb[0].mxu0
    %v832 = vadd.f32 %v717, %v831
    %v833 = vpop.f32.mrb[0].mxu0
    %834 = vdwg.mxu0
    %835 = vst.msk [vmem:[#allocation7] sm:$0xff] %vm50, %v790
    %836 = vst.msk [vmem:[#allocation7 + $0x8] sm:$0xff] %vm50, %v796
    %837 = vst.msk [vmem:[#allocation7 + $0x10] sm:$0xff] %vm50, %v802
    %838 = vst.msk [vmem:[#allocation7 + $0x18] sm:$0xff] %vm50, %v808
    %839 = vst.msk [vmem:[#allocation7 + $0x20] sm:$0xff] %vm50, %v814
    %840 = vst.msk [vmem:[#allocation7 + $0x28] sm:$0xff] %vm50, %v820
    %841 = vst.msk [vmem:[#allocation7 + $0x30] sm:$0xff] %vm50, %v826
    %842 = vst.msk [vmem:[#allocation7 + $0x38] sm:$0xff] %vm50, %v832
    // Predicated region
    $region18: #{nconv_nclv.1} parent=1 // pred_check
      _
    $region19: #{nconv_nclv.1} parent=1 // pred_check_branch
      %844 = sbr.rel (0) target = $region21
    $region20: #{nconv_nclv.1} parent=1 // pred_region
      %s846 = ssub.s32 1024, 1024
      %847 = vsyncadd [#allocation4], %s846
      %s848 = sshll.u32 [#allocation7], 4
      %s849 = int_to_ptr.vmem [resolvable:$true] %s848
      %854 = dma.vmem_to_hbm [thread:$0]  %s849, 1024, %s2, [#allocation4], 128, 128, 8
    $region21: #{nconv_nclv.1} parent=1 // pred_fallthru
      _
    // Predicated region
    $region22: #{nconv_nclv.1} parent=1 // pred_check
      _
    $region23: #{nconv_nclv.1} parent=1 // pred_check_branch
      %856 = sbr.rel (0) target = $region25
    $region24: #{nconv_nclv.1} parent=1 // pred_region
      %857 = dma.done [#allocation4], 1024
    $region25: #{nconv_nclv.1} parent=1 // pred_fallthru
      _
    %858 = vsyncpa [#allocation3], 1
    %859 = vsyncpa [#allocation6], 1
    %860 = vsyncpa [#allocation4], 1

</llo_original>
